<compile_context>
chip_gen: v5e
topology: v5e:2x2
jax: 0.10.0
libtpu: 0.0.40
codegen_flags: <defaults>
</compile_context>

<pallas_src>
import functools

import jax
import jax.numpy as jnp
import numpy as np
from jax.experimental import pallas as pl
from jax.experimental.pallas import tpu as pltpu


# ---------------------------------------------------------------------------
# Kernels
# ---------------------------------------------------------------------------

def _mlp_kernel_resident(x_ref, w1_ref, b1_ref, w2_ref, b2_ref, o_ref):
    """Fused Linear->ReLU->Linear; both (padded) weights stay VMEM-resident."""
    x = x_ref[...]
    h = jnp.dot(x, w1_ref[...], preferred_element_type=jnp.float32)
    h = jnp.maximum(h + b1_ref[...], 0.0)                 # bias kept in f32
    out = jnp.dot(h.astype(w2_ref.dtype), w2_ref[...],
                  preferred_element_type=jnp.float32)
    o_ref[...] = (out + b2_ref[...]).astype(o_ref.dtype)


def _mlp_kernel_htiled(x_ref, w1_ref, b1_ref, w2_ref, b2_ref, o_ref, acc_ref):
    """Hidden-dim tiled: out = sum_k relu(x @ W1[:, k] + b1[k]) @ W2[k, :]."""
    k = pl.program_id(1)

    @pl.when(k == 0)
    def _init():
        acc_ref[...] = jnp.zeros_like(acc_ref)

    h = jnp.dot(x_ref[...], w1_ref[...], preferred_element_type=jnp.float32)
    h = jnp.maximum(h + b1_ref[...], 0.0)
    acc_ref[...] += jnp.dot(h.astype(w2_ref.dtype), w2_ref[...],
                            preferred_element_type=jnp.float32)

    @pl.when(k == pl.num_programs(1) - 1)
    def _finalize():
        o_ref[...] = (acc_ref[...] + b2_ref[...]).astype(o_ref.dtype)


# ---------------------------------------------------------------------------
# Helpers
# ---------------------------------------------------------------------------

def _round_up(n, m):
    return ((n + m - 1) // m) * m


def _cdiv(a, b):
    return -(-a // b)


def _pad2(a, rows, cols):
    pr, pc = rows - a.shape[0], cols - a.shape[1]
    if pr or pc:
        a = jnp.pad(a, ((0, pr), (0, pc)))
    return a


@functools.lru_cache(maxsize=1)
def _tpu_kind():
    try:
        return jax.devices()[0].device_kind.lower()
    except Exception:  # pragma: no cover - defensive
        return ""


def _hw_params():
    kind = _tpu_kind()
    is_v7 = "7" in kind
    big_mxu = is_v7 or ("v6" in kind)                  # 256x256 MXUs
    multi_core = is_v7 or ("v4" in kind) or ("v5p" in kind)
    vmem_bytes = (64 << 20) if is_v7 else (128 << 20)  # physical per TC
    return dict(
        lane_align=256 if big_mxu else 128,
        multi_core=multi_core,
        vmem_bytes=vmem_bytes,
        resident_budget=(36 << 20) if is_v7 else (96 << 20),
        tb_cap=256 if is_v7 else 512,
    )


# ---------------------------------------------------------------------------
# Parameter preparation (hoisted out of the hot path)
# ---------------------------------------------------------------------------

def prepare_meta_sequential_params(w1, b1, w2, b2, compute_dtype=None):
    """Pad + transpose Meta_Sequential weights once into MXU-friendly layouts.

    w1: (H, D), b1: (H,), w2: (O, H), b2: (O,)   (PyTorch nn.Linear layout)
    Optionally cast the weights to `compute_dtype` (e.g. bf16) for the MXU.
    """
    hw = _hw_params()
    la = hw["lane_align"]
    H, D = w1.shape
    O = w2.shape[0]
    Dp = _round_up(max(D, la), la)
    Hp = _round_up(max(H, la), la)
    Op = _round_up(max(O, la), la)
    wdt = compute_dtype if compute_dtype is not None else w1.dtype
    w1t = _pad2(jnp.transpose(w1).astype(wdt), Dp, Hp)            # (Dp, Hp)
    w2t = _pad2(jnp.transpose(w2).astype(wdt), Hp, Op)            # (Hp, Op)
    b1p = _pad2(b1.reshape(1, H).astype(jnp.float32), 1, Hp)      # (1, Hp) f32
    b2p = _pad2(b2.reshape(1, O).astype(jnp.float32), 1, Op)      # (1, Op) f32
    return dict(w1t=w1t, b1p=b1p, w2t=w2t, b2p=b2p, dims=(D, H, O))


# ---------------------------------------------------------------------------
# Forward
# ---------------------------------------------------------------------------

def meta_sequential_apply(x, params, *, force_h_tile=False, force_th=None,
                          force_tb=None):
    """relu(x @ W1.T + b1) @ W2.T + b2 using prepared (padded) params."""
    D, H, O = params["dims"]
    w1t, b1p = params["w1t"], params["b1p"]
    w2t, b2p = params["w2t"], params["b2p"]
    Dp, Hp = w1t.shape
    Op = w2t.shape[1]

    lead = x.shape[:-1]
    assert x.shape[-1] == D, "last dim of x must equal MetaLinear input size"
    x2 = x.reshape(-1, D)
    B = x2.shape[0]
    dt = x2.dtype

    hw = _hw_params()
    it = jnp.dtype(dt).itemsize
    wit = jnp.dtype(w1t.dtype).itemsize
    la = hw["lane_align"]

    # ---- batch tiling (multiple of 8; <8 rows of padding per tile; >=2 grid
    # steps on multi-TensorCore chips so "parallel" can actually shard) -------
    min_steps = 2 if hw["multi_core"] else 1
    Bp8 = _round_up(max(B, 8), 8)
    nt = max(_cdiv(Bp8, hw["tb_cap"]), min_steps)
    nt = max(min(nt, Bp8 // 8), 1)
    TB = _round_up(_cdiv(Bp8, nt), 8)
    if force_tb is not None:
        TB = _round_up(force_tb, 8)

    # ---- resident-weights vs hidden-tiled decision --------------------------
    resident_fp = (2 * TB * (Dp + Op) * it            # x/out tiles (dbl-buffered)
                   + (Dp * Hp + Hp * Op) * wit        # weights (single-buffered)
                   + (Hp + Op) * 4)                   # f32 biases
    use_htile = bool(force_h_tile) or resident_fp > hw["resident_budget"]

    if use_htile:
        TB = min(TB, 256)
    nb = _cdiv(Bp8, TB)
    Bp = nb * TB
    x_p = _pad2(x2, Bp, Dp)

    cost = pl.CostEstimate(
        flops=2 * Bp * Dp * Hp + 2 * Bp * Hp * Op,
        transcendentals=0,
        bytes_accessed=Bp * (Dp + Op) * it + (Dp * Hp + Hp * Op) * wit
                       + (Hp + Op) * 4,
    )

    if not use_htile:
        # Conservative limit: assume weights double-buffered in case the
        # single-buffer request is not honored.
        fp_limit = (2 * TB * (Dp + Op) * it
                    + 2 * (Dp * Hp + Hp * Op) * wit + 2 * (Hp + Op) * 4)
        vmem_limit = int(min(max(fp_limit * 1.3 + (2 << 20), 32 << 20),
                             hw["vmem_bytes"] * 0.9))

        def _resident_call(single_buffer):
            mode = ({"pipeline_mode": pl.Buffered(buffer_count=1)}
                    if single_buffer else {})
            return pl.pallas_call(
                _mlp_kernel_resident,
                out_shape=jax.ShapeDtypeStruct((Bp, Op), dt),
                grid=(nb,),
                in_specs=[
                    pl.BlockSpec((TB, Dp), lambda i: (i, 0)),        # x (streamed)
                    pl.BlockSpec((Dp, Hp), lambda i: (0, 0), **mode),  # W1^T
                    pl.BlockSpec((1, Hp), lambda i: (0, 0), **mode),   # b1 (f32)
                    pl.BlockSpec((Hp, Op), lambda i: (0, 0), **mode),  # W2^T
                    pl.BlockSpec((1, Op), lambda i: (0, 0), **mode),   # b2 (f32)
                ],
                out_specs=pl.BlockSpec((TB, Op), lambda i: (i, 0)),
                compiler_params=pltpu.CompilerParams(
                    dimension_semantics=("parallel",),
                    vmem_limit_bytes=vmem_limit,
                ),
                cost_estimate=cost,
            )(x_p, w1t, b1p, w2t, b2p)

        try:
            out_p = _resident_call(True)
        except Exception:
            # Fallback if single-buffering of resident blocks is unsupported.
            out_p = _resident_call(False)
    else:
        # Hidden-dim tiled fallback: exact because ReLU is per-column of h.
        fixed = 2 * TB * (Dp + Op) * it + TB * Op * 4 + 2 * Op * 4
        per_col = 2 * (Dp + Op) * wit + 2 * 4
        th = (hw["resident_budget"] - fixed) // max(per_col, 1)
        th = max(la, (th // la) * la)
        th = min(th, Hp)
        if force_th is not None:
            th = min(_round_up(force_th, la), Hp)
        while Hp % th != 0:          # la always divides Hp, so this terminates
            th -= la
        TH = th
        nh = Hp // TH

        h_fp = (fixed + 2 * (Dp * TH + TH * Op) * wit + 2 * TH * 4)
        vmem_limit = int(min(max(h_fp * 1.3 + (2 << 20), 32 << 20),
                             hw["vmem_bytes"] * 0.9))

        out_p = pl.pallas_call(
            _mlp_kernel_htiled,
            out_shape=jax.ShapeDtypeStruct((Bp, Op), dt),
            grid=(nb, nh),
            in_specs=[
                pl.BlockSpec((TB, Dp), lambda i, k: (i, 0)),   # x (held per i)
                pl.BlockSpec((Dp, TH), lambda i, k: (0, k)),   # W1^T column slab
                pl.BlockSpec((1, TH), lambda i, k: (0, k)),    # b1 slab (f32)
                pl.BlockSpec((TH, Op), lambda i, k: (k, 0)),   # W2^T row slab
                pl.BlockSpec((1, Op), lambda i, k: (0, 0)),    # b2 (f32)
            ],
            out_specs=pl.BlockSpec((TB, Op), lambda i, k: (i, 0)),
            scratch_shapes=[pltpu.VMEM((TB, Op), jnp.float32)],
            compiler_params=pltpu.CompilerParams(
                dimension_semantics=("parallel", "arbitrary"),
                vmem_limit_bytes=vmem_limit,
            ),
            cost_estimate=cost,
        )(x_p, w1t, b1p, w2t, b2p)

    out = out_p[:B, :O]
    return out.reshape(*lead, O)


def meta_sequential_forward(x, w1, b1, w2, b2, **kwargs):
    """Convenience wrapper: prepares (pads/transposes) weights then applies."""
    params = prepare_meta_sequential_params(w1, b1, w2, b2)
    return meta_sequential_apply(x, params, **kwargs)


def _reference(x, w1, b1, w2, b2):
    h = jnp.maximum(x @ w1.T + b1, 0.0)
    return h @ w2.T + b2


# TODO(synk): MetaModule's meta-learning machinery (update_params / set_param /
# copy parameter rebinding) is training-loop plumbing, not part of the forward
# computation, and is not represented in the kernel.

if __name__ == "__main__":
    # Small shapes implied by Meta_Sequential(input, hidden1, output).
    B, D_IN, HID, OUT = 2, 32, 64, 4

    key = jax.random.PRNGKey(0)
    kx, k1, kb1, k2, kb2 = jax.random.split(key, 5)
    x = jax.random.normal(kx, (B, D_IN), dtype=jnp.float32)
    # PyTorch nn.Linear-style init (uniform in +/- 1/sqrt(fan_in)).
    lim1 = 1.0 / np.sqrt(D_IN)
    lim2 = 1.0 / np.sqrt(HID)
    w1 = jax.random.uniform(k1, (HID, D_IN), jnp.float32, -lim1, lim1)
    b1 = jax.random.uniform(kb1, (HID,), jnp.float32, -lim1, lim1)
    w2 = jax.random.uniform(k2, (OUT, HID), jnp.float32, -lim2, lim2)
    b2 = jax.random.uniform(kb2, (OUT,), jnp.float32, -lim2, lim2)

    # Prepared-params path (weights padded/transposed once, as repeated
    # inference would do) -> resident-weight kernel.
    params = prepare_meta_sequential_params(w1, b1, w2, b2)
    out = jax.block_until_ready(meta_sequential_apply(x, params))
    ref = _reference(x, w1, b1, w2, b2)
    np.testing.assert_allclose(np.asarray(out), np.asarray(ref),
                               rtol=1e-5, atol=1e-5)

    # Also exercise the hidden-dim-tiled fallback (used for large layers /
    # v7x's smaller VMEM) at small shape so both code paths are covered.
    B2, D2, H2, O2 = 12, 48, 600, 20
    kx2, k3, kb3, k4, kb4 = jax.random.split(jax.random.PRNGKey(0), 5)
    x2 = jax.random.normal(kx2, (B2, D2), dtype=jnp.float32)
    l1 = 1.0 / np.sqrt(D2)
    l2 = 1.0 / np.sqrt(H2)
    w1b = jax.random.uniform(k3, (H2, D2), jnp.float32, -l1, l1)
    b1b = jax.random.uniform(kb3, (H2,), jnp.float32, -l1, l1)
    w2b = jax.random.uniform(k4, (O2, H2), jnp.float32, -l2, l2)
    b2b = jax.random.uniform(kb4, (O2,), jnp.float32, -l2, l2)
    out2 = jax.block_until_ready(
        meta_sequential_forward(x2, w1b, b1b, w2b, b2b,
                                force_h_tile=True, force_th=256))
    ref2 = _reference(x2, w1b, b1b, w2b, b2b)
    np.testing.assert_allclose(np.asarray(out2), np.asarray(ref2),
                               rtol=1e-4, atol=1e-4)

    print("KERNEL_OK")
</pallas_src>

<mosaic_0001>
module attributes {stable_mosaic.version = 11 : i64} {
  func.func @_mlp_kernel_resident(%arg0: i32, %arg1: memref<8x128xf32, #tpu.memory_space<vmem>>, %arg2: memref<128x128xf32, #tpu.memory_space<vmem>>, %arg3: memref<1x128xf32, #tpu.memory_space<vmem>>, %arg4: memref<128x128xf32, #tpu.memory_space<vmem>>, %arg5: memref<1x128xf32, #tpu.memory_space<vmem>>, %arg6: memref<8x128xf32, #tpu.memory_space<vmem>>) attributes {dimension_semantics = [#tpu.dimension_semantics<parallel>], iteration_bounds = array<i64: 1>, scalar_prefetch = 0 : i64, scratch_operands = 0 : i64, tpu.core_type = #tpu.core_type<tc>, window_params = [{transform_indices = @transform_0, window_bounds = array<i64: 8, 128>}, {pipeline_mode = #tpu.pipeline_mode<synchronous>, transform_indices = @transform_1, window_bounds = array<i64: 128, 128>}, {pipeline_mode = #tpu.pipeline_mode<synchronous>, transform_indices = @transform_2, window_bounds = array<i64: 1, 128>}, {pipeline_mode = #tpu.pipeline_mode<synchronous>, transform_indices = @transform_3, window_bounds = array<i64: 128, 128>}, {pipeline_mode = #tpu.pipeline_mode<synchronous>, transform_indices = @transform_4, window_bounds = array<i64: 1, 128>}, {transform_indices = @transform_5, window_bounds = array<i64: 8, 128>}]} {
    %c0 = arith.constant 0 : index
    %c0_0 = arith.constant 0 : index
    %0 = vector.load %arg1[%c0, %c0_0] : memref<8x128xf32, #tpu.memory_space<vmem>>, vector<8x128xf32>
    %c0_1 = arith.constant 0 : index
    %c0_2 = arith.constant 0 : index
    %1 = vector.load %arg2[%c0_1, %c0_2] : memref<128x128xf32, #tpu.memory_space<vmem>>, vector<128x128xf32>
    %cst = arith.constant dense<0.000000e+00> : vector<8x128xf32>
    %2 = tpu.matmul %0, %1, %cst {dimension_numbers = #tpu.dot_dimension_numbers<[1], [0], [0], [1], [0, 0, 1, 1], [], []>} : vector<8x128xf32>, vector<128x128xf32>, vector<8x128xf32> -> vector<8x128xf32>
    %c0_3 = arith.constant 0 : index
    %c0_4 = arith.constant 0 : index
    %3 = vector.load %arg3[%c0_3, %c0_4] : memref<1x128xf32, #tpu.memory_space<vmem>>, vector<1x128xf32>
    %4 = vector.broadcast %3 : vector<1x128xf32> to vector<8x128xf32>
    %5 = arith.addf %2, %4 : vector<8x128xf32>
    %cst_5 = arith.constant 0.000000e+00 : f32
    %6 = vector.broadcast %cst_5 : f32 to vector<8x128xf32>
    %7 = arith.maximumf %5, %6 : vector<8x128xf32>
    %c0_6 = arith.constant 0 : index
    %c0_7 = arith.constant 0 : index
    %8 = vector.load %arg4[%c0_6, %c0_7] : memref<128x128xf32, #tpu.memory_space<vmem>>, vector<128x128xf32>
    %cst_8 = arith.constant dense<0.000000e+00> : vector<8x128xf32>
    %9 = tpu.matmul %7, %8, %cst_8 {dimension_numbers = #tpu.dot_dimension_numbers<[1], [0], [0], [1], [0, 0, 1, 1], [], []>} : vector<8x128xf32>, vector<128x128xf32>, vector<8x128xf32> -> vector<8x128xf32>
    %c0_9 = arith.constant 0 : index
    %c0_10 = arith.constant 0 : index
    %10 = vector.load %arg5[%c0_9, %c0_10] : memref<1x128xf32, #tpu.memory_space<vmem>>, vector<1x128xf32>
    %11 = vector.broadcast %10 : vector<1x128xf32> to vector<8x128xf32>
    %12 = arith.addf %9, %11 : vector<8x128xf32>
    %c0_11 = arith.constant 0 : index
    %c0_12 = arith.constant 0 : index
    %13 = vector.load %arg6[%c0_11, %c0_12] : memref<8x128xf32, #tpu.memory_space<vmem>>, vector<8x128xf32>
    tpu.vector_store %arg6[%c0_11, %c0_12], %12 {strides = array<i32>} : memref<8x128xf32, #tpu.memory_space<vmem>>, vector<8x128xf32>,
    return
  }
  func.func @transform_0(%arg0: i32) -> (i32, i32) {
    %c0_i32 = arith.constant 0 : i32
    %c0_i32_0 = arith.constant 0 : i32
    return %arg0, %c0_i32 : i32, i32
  }
  func.func @transform_1(%arg0: i32) -> (i32, i32) {
    %c0_i32 = arith.constant 0 : i32
    %c0_i32_0 = arith.constant 0 : i32
    %c0_i32_1 = arith.constant 0 : i32
    return %c0_i32, %c0_i32_0 : i32, i32
  }
  func.func @transform_2(%arg0: i32) -> (i32, i32) {
    %c0_i32 = arith.constant 0 : i32
    %c0_i32_0 = arith.constant 0 : i32
    %c0_i32_1 = arith.constant 0 : i32
    return %c0_i32, %c0_i32_0 : i32, i32
  }
  func.func @transform_3(%arg0: i32) -> (i32, i32) {
    %c0_i32 = arith.constant 0 : i32
    %c0_i32_0 = arith.constant 0 : i32
    %c0_i32_1 = arith.constant 0 : i32
    return %c0_i32, %c0_i32_0 : i32, i32
  }
  func.func @transform_4(%arg0: i32) -> (i32, i32) {
    %c0_i32 = arith.constant 0 : i32
    %c0_i32_0 = arith.constant 0 : i32
    %c0_i32_1 = arith.constant 0 : i32
    return %c0_i32, %c0_i32_0 : i32, i32
  }
  func.func @transform_5(%arg0: i32) -> (i32, i32) {
    %c0_i32 = arith.constant 0 : i32
    %c0_i32_0 = arith.constant 0 : i32
    return %arg0, %c0_i32 : i32, i32
  }
}

module attributes {stable_mosaic.version = 11 : i64} {
  func.func @_mlp_kernel_resident(%arg0: i32, %arg1: memref<8x128xf32, #tpu.memory_space<vmem>>, %arg2: memref<128x128xf32, #tpu.memory_space<vmem>>, %arg3: memref<1x128xf32, #tpu.memory_space<vmem>>, %arg4: memref<128x128xf32, #tpu.memory_space<vmem>>, %arg5: memref<1x128xf32, #tpu.memory_space<vmem>>, %arg6: memref<8x128xf32, #tpu.memory_space<vmem>>) attributes {dimension_semantics = [#tpu.dimension_semantics<parallel>], iteration_bounds = array<i64: 1>, scalar_prefetch = 0 : i64, scratch_operands = 0 : i64, tpu.core_type = #tpu.core_type<tc>, window_params = [{transform_indices = @transform_0, window_bounds = array<i64: 8, 128>}, {pipeline_mode = #tpu.pipeline_mode<synchronous>, transform_indices = @transform_1, window_bounds = array<i64: 128, 128>}, {pipeline_mode = #tpu.pipeline_mode<synchronous>, transform_indices = @transform_2, window_bounds = array<i64: 1, 128>}, {pipeline_mode = #tpu.pipeline_mode<synchronous>, transform_indices = @transform_3, window_bounds = array<i64: 128, 128>}, {pipeline_mode = #tpu.pipeline_mode<synchronous>, transform_indices = @transform_4, window_bounds = array<i64: 1, 128>}, {transform_indices = @transform_5, window_bounds = array<i64: 8, 128>}]} {
    %c0 = arith.constant 0 : index
    %c0_0 = arith.constant 0 : index
    %0 = vector.load %arg1[%c0, %c0_0] : memref<8x128xf32, #tpu.memory_space<vmem>>, vector<8x128xf32>
    %c0_1 = arith.constant 0 : index
    %c0_2 = arith.constant 0 : index
    %1 = vector.load %arg2[%c0_1, %c0_2] : memref<128x128xf32, #tpu.memory_space<vmem>>, vector<128x128xf32>
    %cst = arith.constant dense<0.000000e+00> : vector<8x128xf32>
    %2 = tpu.matmul %0, %1, %cst {dimension_numbers = #tpu.dot_dimension_numbers<[1], [0], [0], [1], [0, 0, 1, 1], [], []>} : vector<8x128xf32>, vector<128x128xf32>, vector<8x128xf32> -> vector<8x128xf32>
    %c0_3 = arith.constant 0 : index
    %c0_4 = arith.constant 0 : index
    %3 = vector.load %arg3[%c0_3, %c0_4] : memref<1x128xf32, #tpu.memory_space<vmem>>, vector<1x128xf32>
    %4 = vector.broadcast %3 : vector<1x128xf32> to vector<8x128xf32>
    %5 = arith.addf %2, %4 : vector<8x128xf32>
    %cst_5 = arith.constant 0.000000e+00 : f32
    %6 = vector.broadcast %cst_5 : f32 to vector<8x128xf32>
    %7 = arith.maximumf %5, %6 : vector<8x128xf32>
    %c0_6 = arith.constant 0 : index
    %c0_7 = arith.constant 0 : index
    %8 = vector.load %arg4[%c0_6, %c0_7] : memref<128x128xf32, #tpu.memory_space<vmem>>, vector<128x128xf32>
    %cst_8 = arith.constant dense<0.000000e+00> : vector<8x128xf32>
    %9 = tpu.matmul %7, %8, %cst_8 {dimension_numbers = #tpu.dot_dimension_numbers<[1], [0], [0], [1], [0, 0, 1, 1], [], []>} : vector<8x128xf32>, vector<128x128xf32>, vector<8x128xf32> -> vector<8x128xf32>
    %c0_9 = arith.constant 0 : index
    %c0_10 = arith.constant 0 : index
    %10 = vector.load %arg5[%c0_9, %c0_10] : memref<1x128xf32, #tpu.memory_space<vmem>>, vector<1x128xf32>
    %11 = vector.broadcast %10 : vector<1x128xf32> to vector<8x128xf32>
    %12 = arith.addf %9, %11 : vector<8x128xf32>
    %c0_11 = arith.constant 0 : index
    %c0_12 = arith.constant 0 : index
    %13 = vector.load %arg6[%c0_11, %c0_12] : memref<8x128xf32, #tpu.memory_space<vmem>>, vector<8x128xf32>
    tpu.vector_store %arg6[%c0_11, %c0_12], %12 {strides = array<i32>} : memref<8x128xf32, #tpu.memory_space<vmem>>, vector<8x128xf32>,
    return
  }
  func.func @transform_0(%arg0: i32) -> (i32, i32) {
    %c0_i32 = arith.constant 0 : i32
    %c0_i32_0 = arith.constant 0 : i32
    return %arg0, %c0_i32 : i32, i32
  }
  func.func @transform_1(%arg0: i32) -> (i32, i32) {
    %c0_i32 = arith.constant 0 : i32
    %c0_i32_0 = arith.constant 0 : i32
    %c0_i32_1 = arith.constant 0 : i32
    return %c0_i32, %c0_i32_0 : i32, i32
  }
  func.func @transform_2(%arg0: i32) -> (i32, i32) {
    %c0_i32 = arith.constant 0 : i32
    %c0_i32_0 = arith.constant 0 : i32
    %c0_i32_1 = arith.constant 0 : i32
    return %c0_i32, %c0_i32_0 : i32, i32
  }
  func.func @transform_3(%arg0: i32) -> (i32, i32) {
    %c0_i32 = arith.constant 0 : i32
    %c0_i32_0 = arith.constant 0 : i32
    %c0_i32_1 = arith.constant 0 : i32
    return %c0_i32, %c0_i32_0 : i32, i32
  }
  func.func @transform_4(%arg0: i32) -> (i32, i32) {
    %c0_i32 = arith.constant 0 : i32
    %c0_i32_0 = arith.constant 0 : i32
    %c0_i32_1 = arith.constant 0 : i32
    return %c0_i32, %c0_i32_0 : i32, i32
  }
  func.func @transform_5(%arg0: i32) -> (i32, i32) {
    %c0_i32 = arith.constant 0 : i32
    %c0_i32_0 = arith.constant 0 : i32
    return %arg0, %c0_i32 : i32, i32
  }
}

</mosaic_0001>

<llo_original>
// kernel: tpu_custom_call.1
$region0: #{tpu_custom_call.1}
  #allocation0 [shape = 'u32[]', space=smem, size = 0x4, offset = 0x4, fixed_abs, tag = 'smem constant byte address 0x4 - core index']
  #allocation1 [shape = 'u32[72,128]{1,0:T(1,128)}', space=vmem, size = 0x9000, scoped, tag = 'internal scratch']
  %s0 = inlined_call_operand.hbm [shape: f32[8,128], index: 0, kind: input, shape index: {}]
  %s1 = inlined_call_operand.hbm [shape: f32[128,128], index: 1, kind: input, shape index: {}]
  %s2 = inlined_call_operand.vmem [shape: f32[1,128], index: 2, kind: input, shape index: {}]
  %s3 = inlined_call_operand.hbm [shape: f32[128,128], index: 3, kind: input, shape index: {}]
  %s4 = inlined_call_operand.vmem [shape: f32[1,128], index: 4, kind: input, shape index: {}]
  %s5 = inlined_call_operand.hbm [shape: f32[8,128], index: 5, kind: output, shape index: {}]
  %s6 = sld [smem:[#allocation0]]
  $region42: #{tpu_custom_call.1} parent=0
    _
  %s8 = ssub.s32 1, %s6
  %s9 = scalar_select 0, %s8, %s6
  $region1: #{tpu_custom_call.1} parent=0
    #allocation2 [shape = 'u8[4096]{0}', space=vmem, size = 0x1000, scoped, tag = 'input window, operand 0, single buffered']
    #allocation3 [shape = 's32[1]{0}', space=sflag, size = 0x4, scoped, tag = 'scoped memory for tpu_custom_call.1']
    #allocation4 [shape = 's32[1]{0}', space=sflag, size = 0x4, scoped, tag = 'scoped memory for tpu_custom_call.1']
    #allocation5 [shape = 'u8[65536]{0}', space=vmem, size = 0x10000, scoped, tag = 'input window, operand 1, single buffered']
    #allocation6 [shape = 's32[1]{0}', space=sflag, size = 0x4, scoped, tag = 'scoped memory for tpu_custom_call.1']
    #allocation7 [shape = 'u8[65536]{0}', space=vmem, size = 0x10000, scoped, tag = 'input window, operand 3, single buffered']
    #allocation8 [shape = 'u8[4096]{0}', space=vmem, size = 0x1000, scoped, tag = 'output window, operand 0, single buffered']
    %10 = vsyncpa [#allocation3], 0
    %11 = vsyncpa [#allocation6], 0
    %12 = vsyncpa [#allocation4], 0
    // Predicated region
    $region2: #{tpu_custom_call.1} parent=1 // pred_check
      _
    $region3: #{tpu_custom_call.1} parent=1 // pred_check_branch
      %14 = sbr.rel (0) target = $region5
    $region4: #{tpu_custom_call.1} parent=1 // pred_region
      %16 = vsyncadd [#allocation3], 0
      %s18 = sshll.u32 %s0, 4
      %s19 = int_to_ptr.hbm [resolvable:$true] %s18
      %s20 = sshll.u32 [#allocation2], 4
      %s21 = int_to_ptr.vmem [resolvable:$true] %s20
      %23 = dma.hbm_to_vmem [thread:$0]  %s19, 128, %s21, [#allocation3]
    $region5: #{tpu_custom_call.1} parent=1 // pred_fallthru
      _
    // Predicated region
    $region6: #{tpu_custom_call.1} parent=1 // pred_check
      _
    $region7: #{tpu_custom_call.1} parent=1 // pred_check_branch
      %25 = sbr.rel (0) target = $region9
    $region8: #{tpu_custom_call.1} parent=1 // pred_region
      %27 = vsyncadd [#allocation6], 0
      %s28 = sshll.u32 %s1, 4
      %s29 = int_to_ptr.hbm [resolvable:$true] %s28
      %s30 = sshll.u32 [#allocation5], 4
      %s31 = int_to_ptr.vmem [resolvable:$true] %s30
      %36 = dma.hbm_to_vmem [thread:$0]  %s29, 2048, %s31, [#allocation6], 128, 128, 8
    $region9: #{tpu_custom_call.1} parent=1 // pred_fallthru
      _
    // Predicated region
    $region10: #{tpu_custom_call.1} parent=1 // pred_check
      _
    $region11: #{tpu_custom_call.1} parent=1 // pred_check_branch
      %38 = sbr.rel (0) target = $region13
    $region12: #{tpu_custom_call.1} parent=1 // pred_region
      _
    $region13: #{tpu_custom_call.1} parent=1 // pred_fallthru
      _
    // Predicated region
    $region14: #{tpu_custom_call.1} parent=1 // pred_check
      _
    $region15: #{tpu_custom_call.1} parent=1 // pred_check_branch
      %40 = sbr.rel (0) target = $region17
    $region16: #{tpu_custom_call.1} parent=1 // pred_region
      %42 = vsyncadd [#allocation6], 0
      %s43 = sshll.u32 %s3, 4
      %s44 = int_to_ptr.hbm [resolvable:$true] %s43
      %s45 = sshll.u32 [#allocation7], 4
      %s46 = int_to_ptr.vmem [resolvable:$true] %s45
      %51 = dma.hbm_to_vmem [thread:$0]  %s44, 2048, %s46, [#allocation6], 128, 128, 8
    $region17: #{tpu_custom_call.1} parent=1 // pred_fallthru
      _
    // Predicated region
    $region18: #{tpu_custom_call.1} parent=1 // pred_check
      _
    $region19: #{tpu_custom_call.1} parent=1 // pred_check_branch
      %53 = sbr.rel (0) target = $region21
    $region20: #{tpu_custom_call.1} parent=1 // pred_region
      _
    $region21: #{tpu_custom_call.1} parent=1 // pred_fallthru
      _
    // Predicated region
    $region22: #{tpu_custom_call.1} parent=1 // pred_check
      _
    $region23: #{tpu_custom_call.1} parent=1 // pred_check_branch
      %55 = sbr.rel (0) target = $region25
    $region24: #{tpu_custom_call.1} parent=1 // pred_region
      %57 = dma.done [#allocation3], 128
    $region25: #{tpu_custom_call.1} parent=1 // pred_fallthru
      _
    // Predicated region
    $region26: #{tpu_custom_call.1} parent=1 // pred_check
      _
    $region27: #{tpu_custom_call.1} parent=1 // pred_check_branch
      %59 = sbr.rel (0) target = $region29
    $region28: #{tpu_custom_call.1} parent=1 // pred_region
      %61 = dma.done [#allocation6], 2048
    $region29: #{tpu_custom_call.1} parent=1 // pred_fallthru
      _
    // Predicated region
    $region30: #{tpu_custom_call.1} parent=1 // pred_check
      _
    $region31: #{tpu_custom_call.1} parent=1 // pred_check_branch
      %63 = sbr.rel (0) target = $region33
    $region32: #{tpu_custom_call.1} parent=1 // pred_region
      %65 = dma.done [#allocation6], 2048
    $region33: #{tpu_custom_call.1} parent=1 // pred_fallthru
      _
    %v66 = vld [vmem:[#allocation2] sm:$0xff]
    %v67 = vld [vmem:[#allocation5] sm:$0xff]
    %v68 = vld [vmem:[#allocation5 + $0x8] sm:$0xff]
    %v69 = vld [vmem:[#allocation5 + $0x10] sm:$0xff]
    %v70 = vld [vmem:[#allocation5 + $0x18] sm:$0xff]
    %v71 = vld [vmem:[#allocation5 + $0x20] sm:$0xff]
    %v72 = vld [vmem:[#allocation5 + $0x28] sm:$0xff]
    %v73 = vld [vmem:[#allocation5 + $0x30] sm:$0xff]
    %v74 = vld [vmem:[#allocation5 + $0x38] sm:$0xff]
    %v75 = vld [vmem:[#allocation5 + $0x40] sm:$0xff]
    %v76 = vld [vmem:[#allocation5 + $0x48] sm:$0xff]
    %v77 = vld [vmem:[#allocation5 + $0x50] sm:$0xff]
    %v78 = vld [vmem:[#allocation5 + $0x58] sm:$0xff]
    %v79 = vld [vmem:[#allocation5 + $0x60] sm:$0xff]
    %v80 = vld [vmem:[#allocation5 + $0x68] sm:$0xff]
    %v81 = vld [vmem:[#allocation5 + $0x70] sm:$0xff]
    %v82 = vld [vmem:[#allocation5 + $0x78] sm:$0xff]
    %v83 = vld [vmem:[%s2] sm:$0x1]
    %v85 = vperm.slane %v83, 0
    %87 = vmatpush.msra.mxu0 %v82
    %88 = vmatpush.msra.mxu0 %v81
    %89 = vmatpush.msra.mxu0 %v80
    %90 = vmatpush.msra.mxu0 %v79
    %91 = vmatpush.msra.mxu0 %v78
    %92 = vmatpush.msra.mxu0 %v77
    %93 = vmatpush.msra.mxu0 %v76
    %94 = vmatpush.msra.mxu0 %v75
    %95 = vmatpush.msra.mxu0 %v74
    %96 = vmatpush.msra.mxu0 %v73
    %97 = vmatpush.msra.mxu0 %v72
    %98 = vmatpush.msra.mxu0 %v71
    %99 = vmatpush.msra.mxu0 %v70
    %100 = vmatpush.msra.mxu0 %v69
    %101 = vmatpush.msra.mxu0 %v68
    %102 = vmatpush.msra.mxu0 %v67
    %103 = vmatmul.f32.gmra.mxu0 %v66
    %v104 = vpop.f32.mrf.mxu0
    %v105 = vadd.f32 %v85, %v104
    %106 = vdwg.mxu0
    %v107 = vmax.f32 %v105, 0.0
    %v108 = vld [vmem:[#allocation7] sm:$0xff]
    %v109 = vld [vmem:[#allocation7 + $0x8] sm:$0xff]
    %v110 = vld [vmem:[#allocation7 + $0x10] sm:$0xff]
    %v111 = vld [vmem:[#allocation7 + $0x18] sm:$0xff]
    %v112 = vld [vmem:[#allocation7 + $0x20] sm:$0xff]
    %v113 = vld [vmem:[#allocation7 + $0x28] sm:$0xff]
    %v114 = vld [vmem:[#allocation7 + $0x30] sm:$0xff]
    %v115 = vld [vmem:[#allocation7 + $0x38] sm:$0xff]
    %v116 = vld [vmem:[#allocation7 + $0x40] sm:$0xff]
    %v117 = vld [vmem:[#allocation7 + $0x48] sm:$0xff]
    %v118 = vld [vmem:[#allocation7 + $0x50] sm:$0xff]
    %v119 = vld [vmem:[#allocation7 + $0x58] sm:$0xff]
    %v120 = vld [vmem:[#allocation7 + $0x60] sm:$0xff]
    %v121 = vld [vmem:[#allocation7 + $0x68] sm:$0xff]
    %v122 = vld [vmem:[#allocation7 + $0x70] sm:$0xff]
    %v123 = vld [vmem:[#allocation7 + $0x78] sm:$0xff]
    %v124 = vld [vmem:[%s4] sm:$0x1]
    %v126 = vperm.slane %v124, 0
    %128 = vmatpush.msra.mxu0 %v123
    %129 = vmatpush.msra.mxu0 %v122
    %130 = vmatpush.msra.mxu0 %v121
    %131 = vmatpush.msra.mxu0 %v120
    %132 = vmatpush.msra.mxu0 %v119
    %133 = vmatpush.msra.mxu0 %v118
    %134 = vmatpush.msra.mxu0 %v117
    %135 = vmatpush.msra.mxu0 %v116
    %136 = vmatpush.msra.mxu0 %v115
    %137 = vmatpush.msra.mxu0 %v114
    %138 = vmatpush.msra.mxu0 %v113
    %139 = vmatpush.msra.mxu0 %v112
    %140 = vmatpush.msra.mxu0 %v111
    %141 = vmatpush.msra.mxu0 %v110
    %142 = vmatpush.msra.mxu0 %v109
    %143 = vmatpush.msra.mxu0 %v108
    %144 = vmatmul.f32.gmra.mxu0 %v107
    %v145 = vpop.f32.mrf.mxu0
    %v146 = vadd.f32 %v126, %v145
    %147 = vdwg.mxu0
    %148 = vst [vmem:[#allocation8] sm:$0xff] %v146
    // Predicated region
    $region34: #{tpu_custom_call.1} parent=1 // pred_check
      _
    $region35: #{tpu_custom_call.1} parent=1 // pred_check_branch
      %150 = sbr.rel (0) target = $region37
    $region36: #{tpu_custom_call.1} parent=1 // pred_region
      %152 = vsyncadd [#allocation4], 0
      %s154 = sshll.u32 [#allocation8], 4
      %s155 = int_to_ptr.vmem [resolvable:$true] %s154
      %s156 = sshll.u32 %s5, 4
      %s157 = int_to_ptr.hbm [resolvable:$true] %s156
      %159 = dma.vmem_to_hbm [thread:$0]  %s155, 128, %s157, [#allocation4]
    $region37: #{tpu_custom_call.1} parent=1 // pred_fallthru
      _
    // Predicated region
    $region38: #{tpu_custom_call.1} parent=1 // pred_check
      _
    $region39: #{tpu_custom_call.1} parent=1 // pred_check_branch
      %161 = sbr.rel (0) target = $region41
    $region40: #{tpu_custom_call.1} parent=1 // pred_region
      %163 = dma.done [#allocation4], 128
    $region41: #{tpu_custom_call.1} parent=1 // pred_fallthru
      _
    %164 = vsyncpa [#allocation3], 1
    %165 = vsyncpa [#allocation6], 1
    %166 = vsyncpa [#allocation4], 1

// kernel: tpu_custom_call.1
$region0: #{tpu_custom_call.1}
  #allocation0 [shape = 'u32[]', space=smem, size = 0x4, offset = 0x4, fixed_abs, tag = 'smem constant byte address 0x4 - core index']
  #allocation1 [shape = 'u32[72,128]{1,0:T(1,128)}', space=vmem, size = 0x9000, scoped, tag = 'internal scratch']
  %s0 = inlined_call_operand.hbm [shape: f32[8,128], index: 0, kind: input, shape index: {}]
  %s1 = inlined_call_operand.hbm [shape: f32[128,128], index: 1, kind: input, shape index: {}]
  %s2 = inlined_call_operand.vmem [shape: f32[1,128], index: 2, kind: input, shape index: {}]
  %s3 = inlined_call_operand.hbm [shape: f32[128,128], index: 3, kind: input, shape index: {}]
  %s4 = inlined_call_operand.vmem [shape: f32[1,128], index: 4, kind: input, shape index: {}]
  %s5 = inlined_call_operand.hbm [shape: f32[8,128], index: 5, kind: output, shape index: {}]
  %s6 = sld [smem:[#allocation0]]
  $region42: #{tpu_custom_call.1} parent=0
    _
  %s8 = ssub.s32 1, %s6
  %s9 = scalar_select 0, %s8, %s6
  $region1: #{tpu_custom_call.1} parent=0
    #allocation2 [shape = 'u8[4096]{0}', space=vmem, size = 0x1000, scoped, tag = 'input window, operand 0, single buffered']
    #allocation3 [shape = 's32[1]{0}', space=sflag, size = 0x4, scoped, tag = 'scoped memory for tpu_custom_call.1']
    #allocation4 [shape = 's32[1]{0}', space=sflag, size = 0x4, scoped, tag = 'scoped memory for tpu_custom_call.1']
    #allocation5 [shape = 'u8[65536]{0}', space=vmem, size = 0x10000, scoped, tag = 'input window, operand 1, single buffered']
    #allocation6 [shape = 's32[1]{0}', space=sflag, size = 0x4, scoped, tag = 'scoped memory for tpu_custom_call.1']
    #allocation7 [shape = 'u8[65536]{0}', space=vmem, size = 0x10000, scoped, tag = 'input window, operand 3, single buffered']
    #allocation8 [shape = 'u8[4096]{0}', space=vmem, size = 0x1000, scoped, tag = 'output window, operand 0, single buffered']
    %10 = vsyncpa [#allocation3], 0
    %11 = vsyncpa [#allocation6], 0
    %12 = vsyncpa [#allocation4], 0
    // Predicated region
    $region2: #{tpu_custom_call.1} parent=1 // pred_check
      _
    $region3: #{tpu_custom_call.1} parent=1 // pred_check_branch
      %14 = sbr.rel (0) target = $region5
    $region4: #{tpu_custom_call.1} parent=1 // pred_region
      %16 = vsyncadd [#allocation3], 0
      %s18 = sshll.u32 %s0, 4
      %s19 = int_to_ptr.hbm [resolvable:$true] %s18
      %s20 = sshll.u32 [#allocation2], 4
      %s21 = int_to_ptr.vmem [resolvable:$true] %s20
      %23 = dma.hbm_to_vmem [thread:$0]  %s19, 128, %s21, [#allocation3]
    $region5: #{tpu_custom_call.1} parent=1 // pred_fallthru
      _
    // Predicated region
    $region6: #{tpu_custom_call.1} parent=1 // pred_check
      _
    $region7: #{tpu_custom_call.1} parent=1 // pred_check_branch
      %25 = sbr.rel (0) target = $region9
    $region8: #{tpu_custom_call.1} parent=1 // pred_region
      %27 = vsyncadd [#allocation6], 0
      %s28 = sshll.u32 %s1, 4
      %s29 = int_to_ptr.hbm [resolvable:$true] %s28
      %s30 = sshll.u32 [#allocation5], 4
      %s31 = int_to_ptr.vmem [resolvable:$true] %s30
      %36 = dma.hbm_to_vmem [thread:$0]  %s29, 2048, %s31, [#allocation6], 128, 128, 8
    $region9: #{tpu_custom_call.1} parent=1 // pred_fallthru
      _
    // Predicated region
    $region10: #{tpu_custom_call.1} parent=1 // pred_check
      _
    $region11: #{tpu_custom_call.1} parent=1 // pred_check_branch
      %38 = sbr.rel (0) target = $region13
    $region12: #{tpu_custom_call.1} parent=1 // pred_region
      _
    $region13: #{tpu_custom_call.1} parent=1 // pred_fallthru
      _
    // Predicated region
    $region14: #{tpu_custom_call.1} parent=1 // pred_check
      _
    $region15: #{tpu_custom_call.1} parent=1 // pred_check_branch
      %40 = sbr.rel (0) target = $region17
    $region16: #{tpu_custom_call.1} parent=1 // pred_region
      %42 = vsyncadd [#allocation6], 0
      %s43 = sshll.u32 %s3, 4
      %s44 = int_to_ptr.hbm [resolvable:$true] %s43
      %s45 = sshll.u32 [#allocation7], 4
      %s46 = int_to_ptr.vmem [resolvable:$true] %s45
      %51 = dma.hbm_to_vmem [thread:$0]  %s44, 2048, %s46, [#allocation6], 128, 128, 8
    $region17: #{tpu_custom_call.1} parent=1 // pred_fallthru
      _
    // Predicated region
    $region18: #{tpu_custom_call.1} parent=1 // pred_check
      _
    $region19: #{tpu_custom_call.1} parent=1 // pred_check_branch
      %53 = sbr.rel (0) target = $region21
    $region20: #{tpu_custom_call.1} parent=1 // pred_region
      _
    $region21: #{tpu_custom_call.1} parent=1 // pred_fallthru
      _
    // Predicated region
    $region22: #{tpu_custom_call.1} parent=1 // pred_check
      _
    $region23: #{tpu_custom_call.1} parent=1 // pred_check_branch
      %55 = sbr.rel (0) target = $region25
    $region24: #{tpu_custom_call.1} parent=1 // pred_region
      %57 = dma.done [#allocation3], 128
    $region25: #{tpu_custom_call.1} parent=1 // pred_fallthru
      _
    // Predicated region
    $region26: #{tpu_custom_call.1} parent=1 // pred_check
      _
    $region27: #{tpu_custom_call.1} parent=1 // pred_check_branch
      %59 = sbr.rel (0) target = $region29
    $region28: #{tpu_custom_call.1} parent=1 // pred_region
      %61 = dma.done [#allocation6], 2048
    $region29: #{tpu_custom_call.1} parent=1 // pred_fallthru
      _
    // Predicated region
    $region30: #{tpu_custom_call.1} parent=1 // pred_check
      _
    $region31: #{tpu_custom_call.1} parent=1 // pred_check_branch
      %63 = sbr.rel (0) target = $region33
    $region32: #{tpu_custom_call.1} parent=1 // pred_region
      %65 = dma.done [#allocation6], 2048
    $region33: #{tpu_custom_call.1} parent=1 // pred_fallthru
      _
    %v66 = vld [vmem:[#allocation2] sm:$0xff]
    %v67 = vld [vmem:[#allocation5] sm:$0xff]
    %v68 = vld [vmem:[#allocation5 + $0x8] sm:$0xff]
    %v69 = vld [vmem:[#allocation5 + $0x10] sm:$0xff]
    %v70 = vld [vmem:[#allocation5 + $0x18] sm:$0xff]
    %v71 = vld [vmem:[#allocation5 + $0x20] sm:$0xff]
    %v72 = vld [vmem:[#allocation5 + $0x28] sm:$0xff]
    %v73 = vld [vmem:[#allocation5 + $0x30] sm:$0xff]
    %v74 = vld [vmem:[#allocation5 + $0x38] sm:$0xff]
    %v75 = vld [vmem:[#allocation5 + $0x40] sm:$0xff]
    %v76 = vld [vmem:[#allocation5 + $0x48] sm:$0xff]
    %v77 = vld [vmem:[#allocation5 + $0x50] sm:$0xff]
    %v78 = vld [vmem:[#allocation5 + $0x58] sm:$0xff]
    %v79 = vld [vmem:[#allocation5 + $0x60] sm:$0xff]
    %v80 = vld [vmem:[#allocation5 + $0x68] sm:$0xff]
    %v81 = vld [vmem:[#allocation5 + $0x70] sm:$0xff]
    %v82 = vld [vmem:[#allocation5 + $0x78] sm:$0xff]
    %v83 = vld [vmem:[%s2] sm:$0x1]
    %v85 = vperm.slane %v83, 0
    %87 = vmatpush.msra.mxu0 %v82
    %88 = vmatpush.msra.mxu0 %v81
    %89 = vmatpush.msra.mxu0 %v80
    %90 = vmatpush.msra.mxu0 %v79
    %91 = vmatpush.msra.mxu0 %v78
    %92 = vmatpush.msra.mxu0 %v77
    %93 = vmatpush.msra.mxu0 %v76
    %94 = vmatpush.msra.mxu0 %v75
    %95 = vmatpush.msra.mxu0 %v74
    %96 = vmatpush.msra.mxu0 %v73
    %97 = vmatpush.msra.mxu0 %v72
    %98 = vmatpush.msra.mxu0 %v71
    %99 = vmatpush.msra.mxu0 %v70
    %100 = vmatpush.msra.mxu0 %v69
    %101 = vmatpush.msra.mxu0 %v68
    %102 = vmatpush.msra.mxu0 %v67
    %103 = vmatmul.f32.gmra.mxu0 %v66
    %v104 = vpop.f32.mrf.mxu0
    %v105 = vadd.f32 %v85, %v104
    %106 = vdwg.mxu0
    %v107 = vmax.f32 %v105, 0.0
    %v108 = vld [vmem:[#allocation7] sm:$0xff]
    %v109 = vld [vmem:[#allocation7 + $0x8] sm:$0xff]
    %v110 = vld [vmem:[#allocation7 + $0x10] sm:$0xff]
    %v111 = vld [vmem:[#allocation7 + $0x18] sm:$0xff]
    %v112 = vld [vmem:[#allocation7 + $0x20] sm:$0xff]
    %v113 = vld [vmem:[#allocation7 + $0x28] sm:$0xff]
    %v114 = vld [vmem:[#allocation7 + $0x30] sm:$0xff]
    %v115 = vld [vmem:[#allocation7 + $0x38] sm:$0xff]
    %v116 = vld [vmem:[#allocation7 + $0x40] sm:$0xff]
    %v117 = vld [vmem:[#allocation7 + $0x48] sm:$0xff]
    %v118 = vld [vmem:[#allocation7 + $0x50] sm:$0xff]
    %v119 = vld [vmem:[#allocation7 + $0x58] sm:$0xff]
    %v120 = vld [vmem:[#allocation7 + $0x60] sm:$0xff]
    %v121 = vld [vmem:[#allocation7 + $0x68] sm:$0xff]
    %v122 = vld [vmem:[#allocation7 + $0x70] sm:$0xff]
    %v123 = vld [vmem:[#allocation7 + $0x78] sm:$0xff]
    %v124 = vld [vmem:[%s4] sm:$0x1]
    %v126 = vperm.slane %v124, 0
    %128 = vmatpush.msra.mxu0 %v123
    %129 = vmatpush.msra.mxu0 %v122
    %130 = vmatpush.msra.mxu0 %v121
    %131 = vmatpush.msra.mxu0 %v120
    %132 = vmatpush.msra.mxu0 %v119
    %133 = vmatpush.msra.mxu0 %v118
    %134 = vmatpush.msra.mxu0 %v117
    %135 = vmatpush.msra.mxu0 %v116
    %136 = vmatpush.msra.mxu0 %v115
    %137 = vmatpush.msra.mxu0 %v114
    %138 = vmatpush.msra.mxu0 %v113
    %139 = vmatpush.msra.mxu0 %v112
    %140 = vmatpush.msra.mxu0 %v111
    %141 = vmatpush.msra.mxu0 %v110
    %142 = vmatpush.msra.mxu0 %v109
    %143 = vmatpush.msra.mxu0 %v108
    %144 = vmatmul.f32.gmra.mxu0 %v107
    %v145 = vpop.f32.mrf.mxu0
    %v146 = vadd.f32 %v126, %v145
    %147 = vdwg.mxu0
    %148 = vst [vmem:[#allocation8] sm:$0xff] %v146
    // Predicated region
    $region34: #{tpu_custom_call.1} parent=1 // pred_check
      _
    $region35: #{tpu_custom_call.1} parent=1 // pred_check_branch
      %150 = sbr.rel (0) target = $region37
    $region36: #{tpu_custom_call.1} parent=1 // pred_region
      %152 = vsyncadd [#allocation4], 0
      %s154 = sshll.u32 [#allocation8], 4
      %s155 = int_to_ptr.vmem [resolvable:$true] %s154
      %s156 = sshll.u32 %s5, 4
      %s157 = int_to_ptr.hbm [resolvable:$true] %s156
      %159 = dma.vmem_to_hbm [thread:$0]  %s155, 128, %s157, [#allocation4]
    $region37: #{tpu_custom_call.1} parent=1 // pred_fallthru
      _
    // Predicated region
    $region38: #{tpu_custom_call.1} parent=1 // pred_check
      _
    $region39: #{tpu_custom_call.1} parent=1 // pred_check_branch
      %161 = sbr.rel (0) target = $region41
    $region40: #{tpu_custom_call.1} parent=1 // pred_region
      %163 = dma.done [#allocation4], 128
    $region41: #{tpu_custom_call.1} parent=1 // pred_fallthru
      _
    %164 = vsyncpa [#allocation3], 1
    %165 = vsyncpa [#allocation6], 1
    %166 = vsyncpa [#allocation4], 1

</llo_original>
